<compile_context>
chip_gen: v7x
topology: tpu7x:2x2x1
jax: 0.10.0
libtpu: 0.0.40
codegen_flags: <defaults>
</compile_context>

<pallas_src>
import functools
import numpy as np
import jax
import jax.numpy as jnp
from jax.experimental import pallas as pl
from jax.experimental.pallas import tpu as pltpu


def _ceil_to(x, m):
    return ((x + m - 1) // m) * m


def _pick_tk(Kp):
    """Largest 128-multiple K tile (<= 2048) that divides Kp."""
    if Kp <= 2048:
        return Kp
    for tk in (2048, 1536, 1024, 768, 512, 384, 256, 128):
        if Kp % tk == 0:
            return tk
    return 128


# ----------------------------- Pallas kernels -----------------------------

def _unpack(refs, use_scale, has_res):
    a_ref, b_ref = refs[0], refs[1]
    idx = 2
    s_ref = None
    if use_scale:
        s_ref = refs[idx]
        idx += 1
    c_ref = refs[idx]
    idx += 1
    r_ref = refs[idx] if has_res else None
    o_ref = refs[-1]
    return a_ref, b_ref, s_ref, c_ref, r_ref, o_ref


def _epilogue(y, s_ref, c_ref, r_ref, relu):
    if s_ref is not None:
        y = y * s_ref[...]
    y = y + c_ref[...]
    if r_ref is not None:
        y = y + r_ref[...]
    if relu:
        y = jnp.maximum(y, 0.0)
    return y


def _mm_kernel_single(*refs, relu, use_scale, has_res):
    a_ref, b_ref, s_ref, c_ref, r_ref, o_ref = _unpack(refs, use_scale, has_res)
    y = jnp.dot(a_ref[...], b_ref[...], preferred_element_type=jnp.float32)
    o_ref[...] = _epilogue(y, s_ref, c_ref, r_ref, relu)


def _mm_kernel_multi(*refs, relu, use_scale, has_res, nk):
    a_ref, b_ref, s_ref, c_ref, r_ref, o_ref = _unpack(refs, use_scale, has_res)
    k = pl.program_id(2)

    @pl.when(k == 0)
    def _():
        o_ref[...] = jnp.zeros_like(o_ref)

    # Accumulate directly into the resident output block (no acc scratch).
    o_ref[...] += jnp.dot(a_ref[...], b_ref[...],
                          preferred_element_type=jnp.float32)

    @pl.when(k == nk - 1)
    def _():
        o_ref[...] = _epilogue(o_ref[...], s_ref, c_ref, r_ref, relu)


_MM_CACHE = {}


def _get_mm_call(Mp, Kp, Np, TM, TN, TK, relu, use_scale, has_res):
    key = (Mp, Kp, Np, TM, TN, TK, relu, use_scale, has_res)
    if key in _MM_CACHE:
        return _MM_CACHE[key]
    nm, nn, nk = Mp // TM, Np // TN, Kp // TK

    if nk == 1:
        kern = functools.partial(_mm_kernel_single, relu=relu,
                                 use_scale=use_scale, has_res=has_res)
        grid = (nm, nn)
        a_spec = pl.BlockSpec((TM, Kp), lambda i, j: (i, 0))
        b_spec = pl.BlockSpec((Kp, TN), lambda i, j: (0, j))
        v_spec = pl.BlockSpec((1, TN), lambda i, j: (0, j))
        mn_spec = pl.BlockSpec((TM, TN), lambda i, j: (i, j))
        dims = ("parallel", "parallel")
        ak = Kp
    else:
        kern = functools.partial(_mm_kernel_multi, relu=relu,
                                 use_scale=use_scale, has_res=has_res, nk=nk)
        grid = (nm, nn, nk)
        a_spec = pl.BlockSpec((TM, TK), lambda i, j, k: (i, k))
        b_spec = pl.BlockSpec((TK, TN), lambda i, j, k: (k, j))
        v_spec = pl.BlockSpec((1, TN), lambda i, j, k: (0, j))
        mn_spec = pl.BlockSpec((TM, TN), lambda i, j, k: (i, j))
        dims = ("parallel", "parallel", "arbitrary")
        ak = TK

    in_specs = [a_spec, b_spec]
    if use_scale:
        in_specs.append(v_spec)
    in_specs.append(v_spec)
    if has_res:
        in_specs.append(mn_spec)

    # VMEM budget from live buffers (double-buffered ins, resident out) with
    # headroom, capped well under v7x's 64 MiB / TensorCore.
    est = (2 * TM * ak * 2) + (2 * ak * TN * 2) + (2 * TM * TN * 4) + (4 * TN * 8)
    if has_res:
        est += 2 * TM * TN * 4
    vmem_limit = int(min(48 * 1024 * 1024, max(32 * 1024 * 1024, 4 * est)))

    call = pl.pallas_call(
        kern,
        out_shape=jax.ShapeDtypeStruct((Mp, Np), jnp.float32),
        grid_spec=pltpu.PrefetchScalarGridSpec(
            num_scalar_prefetch=0,
            grid=grid,
            in_specs=in_specs,
            out_specs=mn_spec),
        compiler_params=pltpu.CompilerParams(
            dimension_semantics=dims,
            vmem_limit_bytes=vmem_limit),
    )
    _MM_CACHE[key] = call
    return call


def matmul_fused(a, w_padded, scale_padded, bias_padded, n_out, relu,
                 residual=None):
    """out[:M, :n_out] = relu?((a @ w) * scale + bias (+ residual)).

    `w_padded` is bf16 (Kp, Np); `scale_padded` / `bias_padded` are f32 (1, Np)
    (scale may be None -> identity). Accumulation is f32 on the MXU.
    """
    M, K = a.shape
    Kp, Np = w_padded.shape
    TM = min(256, _ceil_to(M, 16))
    Mp = _ceil_to(M, TM)
    TN = 256 if Np % 256 == 0 else 128
    TK = _pick_tk(Kp)

    a_p = a.astype(jnp.bfloat16)
    if (Mp, Kp) != (M, K):
        a_p = jnp.pad(a_p, ((0, Mp - M), (0, Kp - K)))

    args = [a_p, w_padded]
    if scale_padded is not None:
        args.append(scale_padded)
    args.append(bias_padded)
    if residual is not None:
        r = residual.astype(jnp.float32)
        rM, rN = r.shape
        if (Mp, Np) != (rM, rN):
            r = jnp.pad(r, ((0, Mp - rM), (0, Np - rN)))
        args.append(r)

    call = _get_mm_call(Mp, Kp, Np, TM, TN, TK, relu,
                        scale_padded is not None, residual is not None)
    out = call(*args)
    return out[:M, :n_out]


# ----------------------------- conv / pool glue -----------------------------

def _extract_patches(x, kh, kw, stride, pad):
    N, H, W, C = x.shape
    if pad > 0:
        x = jnp.pad(x, ((0, 0), (pad, pad), (pad, pad), (0, 0)))
    Ho = (H + 2 * pad - kh) // stride + 1
    Wo = (W + 2 * pad - kw) // stride + 1
    cols = []
    for i in range(kh):
        for j in range(kw):
            cols.append(x[:, i:i + stride * (Ho - 1) + 1:stride,
                          j:j + stride * (Wo - 1) + 1:stride, :])
    p = jnp.stack(cols, axis=3)  # (N, Ho, Wo, kh*kw, C)
    return p.reshape(N * Ho * Wo, kh * kw * C), (N, Ho, Wo)


def conv_apply(x, cp, stride, pad, relu, residual=None):
    kh, kw = cp['k']
    N, H, W, C = x.shape
    if kh == 1 and kw == 1 and pad == 0:
        xs = x[:, ::stride, ::stride, :] if stride > 1 else x
        Ho, Wo = xs.shape[1], xs.shape[2]
        patches = xs.reshape(N * Ho * Wo, C)
    else:
        # TODO(synk): 3x3 stride-1 convs still use im2col; a halo-tiled BlockSpec
        #             feed would remove the patch HBM traffic.
        patches, (N, Ho, Wo) = _extract_patches(x, kh, kw, stride, pad)
    cout = cp['cout']
    res = None if residual is None else residual.reshape(N * Ho * Wo, cout)
    out = matmul_fused(patches, cp['w'], cp['scale'], cp['bias'], cout, relu, res)
    return out.reshape(N, Ho, Wo, cout)


def convtranspose_2x2_apply(x, p):
    # nn.ConvTranspose2d(kernel_size=2, stride=2): out[2i+a, 2j+b] = x[i,j] @ W[:, a, b, :] + bias
    N, H, W, Cin = x.shape
    cout = p['cout']
    r = matmul_fused(x.reshape(N * H * W, Cin), p['w'], None, p['bias'],
                     4 * cout, relu=False)
    r = r.reshape(N, H, W, 2, 2, cout)
    r = jnp.transpose(r, (0, 1, 3, 2, 4, 5)).reshape(N, 2 * H, 2 * W, cout)
    return r


def maxpool_3x3_s2_p1(x):
    # Elementwise max over the 9 shifted stride-2 slices (lane-dense VPU work,
    # no 9x patch materialization).
    N, H, W, C = x.shape
    neg = jnp.finfo(jnp.float32).min
    xp = jnp.pad(x, ((0, 0), (1, 1), (1, 1), (0, 0)), constant_values=neg)
    Ho = (H + 2 - 3) // 2 + 1
    Wo = (W + 2 - 3) // 2 + 1
    out = None
    for di in range(3):
        for dj in range(3):
            v = xp[:, di:di + 2 * (Ho - 1) + 1:2, dj:dj + 2 * (Wo - 1) + 1:2, :]
            out = v if out is None else jnp.maximum(out, v)
    return out


# ----------------------------- parameter init -----------------------------

class KeyGen:
    def __init__(self, seed):
        self._key = jax.random.PRNGKey(seed)

    def __call__(self):
        self._key, k = jax.random.split(self._key)
        return k


def _pad_wmat(w2, K, cout):
    Kp = _ceil_to(K, 128)
    Np = _ceil_to(cout, 128)
    wp = jnp.zeros((Kp, Np), jnp.bfloat16).at[:K, :cout].set(w2.astype(jnp.bfloat16))
    return wp, Np


def _pad_vec(v, Np):
    v = v.astype(jnp.float32).reshape(1, -1)
    if v.shape[1] != Np:
        v = jnp.pad(v, ((0, 0), (0, Np - v.shape[1])))
    return v


def _make_conv(kg, cin, cout, k, use_bn, conv_bias):
    fan_in = cin * k * k
    w = jax.random.normal(kg(), (k, k, cin, cout), jnp.float32) * np.sqrt(2.0 / fan_in)
    b = (0.01 * jax.random.normal(kg(), (cout,), jnp.float32)
         if conv_bias else jnp.zeros((cout,), jnp.float32))
    if use_bn:
        gamma = 1.0 + 0.1 * jax.random.normal(kg(), (cout,), jnp.float32)
        beta = 0.1 * jax.random.normal(kg(), (cout,), jnp.float32)
        rmean = 0.1 * jax.random.normal(kg(), (cout,), jnp.float32)
        rvar = 1.0 + 0.1 * jax.random.uniform(kg(), (cout,), jnp.float32)
        scale = gamma / jnp.sqrt(rvar + 1e-5)
        bias = (b - rmean) * scale + beta
    else:
        scale = None   # identity scale -> no-scale kernel epilogue
        bias = b
    K = k * k * cin
    wp, Np = _pad_wmat(w.reshape(K, cout), K, cout)
    return {'k': (k, k), 'w': wp, 'cout': cout,
            'scale': None if scale is None else _pad_vec(scale, Np),
            'bias': _pad_vec(bias, Np)}


def _make_convtranspose(kg, cin, cout):
    w = jax.random.normal(kg(), (cin, cout, 2, 2), jnp.float32) * np.sqrt(1.0 / (cin * 4))
    b = 0.01 * jax.random.normal(kg(), (cout,), jnp.float32)
    w2 = jnp.transpose(w, (0, 2, 3, 1)).reshape(cin, 4 * cout)  # (cin, kh*kw*cout)
    wp, Np = _pad_wmat(w2, cin, 4 * cout)
    return {'w': wp, 'bias': _pad_vec(jnp.tile(b, 4), Np), 'cout': cout}


def init_uresnet_params(seed, in_channels, out_channels):
    kg = KeyGen(seed)
    P = {}
    # ResNet50 stem (conv 7x7/2 bias=False + BN + ReLU)
    P['conv1'] = _make_conv(kg, in_channels, 64, 7, use_bn=True, conv_bias=False)

    def bottleneck(cin, planes, stride, down):
        p = {'stride': stride,
             'c1': _make_conv(kg, cin, planes, 1, True, False),
             'c2': _make_conv(kg, planes, planes, 3, True, False),
             'c3': _make_conv(kg, planes, planes * 4, 1, True, False)}
        if down:
            p['down'] = _make_conv(kg, cin, planes * 4, 1, True, False)
        return p

    def layer(cin, planes, nblocks, stride):
        blks = [bottleneck(cin, planes, stride, True)]
        for _ in range(nblocks - 1):
            blks.append(bottleneck(planes * 4, planes, 1, False))
        return blks

    P['layer1'] = layer(64, 64, 3, 1)
    P['layer2'] = layer(256, 128, 4, 2)
    P['layer3'] = layer(512, 256, 6, 2)
    P['layer4'] = layer(1024, 512, 3, 2)

    def convblock(cin, cout):
        return _make_conv(kg, cin, cout, 3, True, True)  # Conv(bias) + BN + ReLU

    P['bridge'] = [convblock(2048, 2048), convblock(2048, 2048)]

    def upblock(cin, cout, up_cin=None, up_cout=None):
        up_cin = cin if up_cin is None else up_cin
        up_cout = cout if up_cout is None else up_cout
        return {'up': _make_convtranspose(kg, up_cin, up_cout),
                'cb1': convblock(cin, cout),
                'cb2': convblock(cout, cout)}

    P['up'] = [
        upblock(2048, 1024),
        upblock(1024, 512),
        upblock(512, 256),
        upblock(128 + 64, 128, 256, 128),
        upblock(64 + in_channels, 64, 128, 64),
    ]
    P['out'] = _make_conv(kg, 64, out_channels, 1, use_bn=False, conv_bias=True)
    return P


# ----------------------------- forward -----------------------------

def run_bottleneck(x, p):
    s = p['stride']
    if 'down' in p:
        identity = conv_apply(x, p['down'], stride=s, pad=0, relu=False)
    else:
        identity = x
    y = conv_apply(x, p['c1'], stride=1, pad=0, relu=True)
    y = conv_apply(y, p['c2'], stride=s, pad=1, relu=True)
    # conv3 + BN, add shortcut, ReLU — fused into the kernel epilogue
    y = conv_apply(y, p['c3'], stride=1, pad=0, relu=True, residual=identity)
    return y


def run_upblock(x, skip, p):
    x = convtranspose_2x2_apply(x, p['up'])
    x = jnp.concatenate([x, skip], axis=-1)   # torch.cat dim=1 (channels) in NHWC
    x = conv_apply(x, p['cb1'], stride=1, pad=1, relu=True)
    x = conv_apply(x, p['cb2'], stride=1, pad=1, relu=True)
    return x


def uresnet_forward(x_nchw, P):
    depth = 6
    x = jnp.transpose(x_nchw, (0, 2, 3, 1)).astype(jnp.float32)  # NCHW -> NHWC
    pre = {0: x}
    x = conv_apply(x, P['conv1'], stride=2, pad=3, relu=True)    # input_block
    pre[1] = x
    x = maxpool_3x3_s2_p1(x)                                     # input_pool
    for i, lname in enumerate(['layer1', 'layer2', 'layer3', 'layer4'], start=2):
        for blk in P[lname]:
            x = run_bottleneck(x, blk)
        if i == depth - 1:
            continue
        pre[i] = x
    for cb in P['bridge']:
        x = conv_apply(x, cb, stride=1, pad=1, relu=True)
    for i, ub in enumerate(P['up'], start=1):
        x = run_upblock(x, pre[depth - 1 - i], ub)
    x = conv_apply(x, P['out'], stride=1, pad=0, relu=False)
    return jnp.transpose(x, (0, 3, 1, 2))                        # NHWC -> NCHW


if __name__ == "__main__":
    in_channels, out_channels = 3, 2
    B, H, W = 1, 32, 32  # spatial must be divisible by 32 (5 downsampling steps)
    x = jax.random.normal(jax.random.PRNGKey(0), (B, in_channels, H, W), jnp.float32)
    params = init_uresnet_params(42, in_channels, out_channels)
    y = uresnet_forward(x, params)
    y = jax.block_until_ready(y)
    assert y.shape == (B, out_channels, H, W), y.shape
    assert bool(jnp.all(jnp.isfinite(y)))
    print("KERNEL_OK")
</pallas_src>

<mosaic_0001>
module attributes {stable_mosaic.version = 11 : i64} {
  func.func @_mm_kernel_single(%arg0: i32, %arg1: i32, %arg2: memref<256x256xbf16, #tpu.memory_space<vmem>>, %arg3: memref<256x128xbf16, #tpu.memory_space<vmem>>, %arg4: memref<1x128xf32, #tpu.memory_space<vmem>>, %arg5: memref<1x128xf32, #tpu.memory_space<vmem>>, %arg6: memref<256x128xf32, #tpu.memory_space<vmem>>) attributes {dimension_semantics = [#tpu.dimension_semantics<parallel>, #tpu.dimension_semantics<parallel>], iteration_bounds = array<i64: 1, 1>, scalar_prefetch = 0 : i64, scratch_operands = 0 : i64, tpu.core_type = #tpu.core_type<tc>, window_params = [{transform_indices = @transform_0, window_bounds = array<i64: 256, 256>}, {transform_indices = @transform_1, window_bounds = array<i64: 256, 128>}, {transform_indices = @transform_2, window_bounds = array<i64: 1, 128>}, {transform_indices = @transform_3, window_bounds = array<i64: 1, 128>}, {transform_indices = @transform_4, window_bounds = array<i64: 256, 128>}]} {
    %c0 = arith.constant 0 : index
    %c0_0 = arith.constant 0 : index
    %0 = vector.load %arg2[%c0, %c0_0] : memref<256x256xbf16, #tpu.memory_space<vmem>>, vector<256x256xbf16>
    %c0_1 = arith.constant 0 : index
    %c0_2 = arith.constant 0 : index
    %1 = vector.load %arg3[%c0_1, %c0_2] : memref<256x128xbf16, #tpu.memory_space<vmem>>, vector<256x128xbf16>
    %cst = arith.constant dense<0.000000e+00> : vector<256x128xf32>
    %2 = tpu.matmul %0, %1, %cst {dimension_numbers = #tpu.dot_dimension_numbers<[1], [0], [0], [1], [0, 0, 1, 1], [], []>} : vector<256x256xbf16>, vector<256x128xbf16>, vector<256x128xf32> -> vector<256x128xf32>
    %c0_3 = arith.constant 0 : index
    %c0_4 = arith.constant 0 : index
    %3 = vector.load %arg4[%c0_3, %c0_4] : memref<1x128xf32, #tpu.memory_space<vmem>>, vector<1x128xf32>
    %4 = vector.broadcast %3 : vector<1x128xf32> to vector<256x128xf32>
    %5 = arith.mulf %2, %4 : vector<256x128xf32>
    %c0_5 = arith.constant 0 : index
    %c0_6 = arith.constant 0 : index
    %6 = vector.load %arg5[%c0_5, %c0_6] : memref<1x128xf32, #tpu.memory_space<vmem>>, vector<1x128xf32>
    %7 = vector.broadcast %6 : vector<1x128xf32> to vector<256x128xf32>
    %8 = arith.addf %5, %7 : vector<256x128xf32>
    %cst_7 = arith.constant 0.000000e+00 : f32
    %9 = vector.broadcast %cst_7 : f32 to vector<256x128xf32>
    %10 = arith.maximumf %8, %9 : vector<256x128xf32>
    %c0_8 = arith.constant 0 : index
    %c0_9 = arith.constant 0 : index
    %11 = vector.load %arg6[%c0_8, %c0_9] : memref<256x128xf32, #tpu.memory_space<vmem>>, vector<256x128xf32>
    tpu.vector_store %arg6[%c0_8, %c0_9], %10 {strides = array<i32>} : memref<256x128xf32, #tpu.memory_space<vmem>>, vector<256x128xf32>,
    return
  }
  func.func @transform_0(%arg0: i32, %arg1: i32) -> (i32, i32) {
    %c0_i32 = arith.constant 0 : i32
    %c0_i32_0 = arith.constant 0 : i32
    return %arg0, %c0_i32 : i32, i32
  }
  func.func @transform_1(%arg0: i32, %arg1: i32) -> (i32, i32) {
    %c0_i32 = arith.constant 0 : i32
    %c0_i32_0 = arith.constant 0 : i32
    return %c0_i32, %arg1 : i32, i32
  }
  func.func @transform_2(%arg0: i32, %arg1: i32) -> (i32, i32) {
    %c0_i32 = arith.constant 0 : i32
    %c0_i32_0 = arith.constant 0 : i32
    return %c0_i32, %arg1 : i32, i32
  }
  func.func @transform_3(%arg0: i32, %arg1: i32) -> (i32, i32) {
    %c0_i32 = arith.constant 0 : i32
    %c0_i32_0 = arith.constant 0 : i32
    return %c0_i32, %arg1 : i32, i32
  }
  func.func @transform_4(%arg0: i32, %arg1: i32) -> (i32, i32) {
    %c0_i32 = arith.constant 0 : i32
    return %arg0, %arg1 : i32, i32
  }
}

</mosaic_0001>

<llo_original>
// kernel: tpu_custom_call.1
$region0: #{tpu_custom_call.1}
  #allocation0 [shape = 'u32[]', space=smem, size = 0x4, offset = 0x4, fixed_abs, tag = 'smem constant byte address 0x4 - core index']
  #allocation1 [shape = 'u32[144,128]{1,0:T(1,128)}', space=vmem, size = 0x12000, scoped, tag = 'internal scratch']
  %s0 = inlined_call_operand.hbm [shape: bf16[256,256], index: 0, kind: input, shape index: {}]
  %s1 = inlined_call_operand.hbm [shape: bf16[256,128], index: 1, kind: input, shape index: {}]
  %s2 = inlined_call_operand.vmem [shape: f32[1,128], index: 2, kind: input, shape index: {}]
  %s3 = inlined_call_operand.vmem [shape: f32[1,128], index: 3, kind: input, shape index: {}]
  %s4 = inlined_call_operand.hbm [shape: f32[256,128], index: 4, kind: output, shape index: {}]
  %s5 = sld [smem:[#allocation0]]
  $region34: #{tpu_custom_call.1} parent=0
    _
  %s7 = ssub.s32 1, %s5
  %s8 = scalar_select 0, %s7, %s5
  $region1: #{tpu_custom_call.1} parent=0
    #allocation2 [shape = 'u8[131072]{0}', space=vmem, size = 0x20000, scoped, tag = 'input window, operand 0, single buffered']
    #allocation3 [shape = 's32[1]{0}', space=sflag, size = 0x4, scoped, tag = 'scoped memory for tpu_custom_call.1']
    #allocation4 [shape = 's32[1]{0}', space=sflag, size = 0x4, scoped, tag = 'scoped memory for tpu_custom_call.1']
    #allocation5 [shape = 'u8[65536]{0}', space=vmem, size = 0x10000, scoped, tag = 'input window, operand 1, single buffered']
    #allocation6 [shape = 's32[1]{0}', space=sflag, size = 0x4, scoped, tag = 'scoped memory for tpu_custom_call.1']
    #allocation7 [shape = 'u8[131072]{0}', space=vmem, size = 0x20000, scoped, tag = 'output window, operand 0, single buffered']
    %9 = vsyncpa [#allocation3], 0
    %10 = vsyncpa [#allocation6], 0
    %11 = vsyncpa [#allocation4], 0
    // Predicated region
    $region2: #{tpu_custom_call.1} parent=1 // pred_check
      _
    $region3: #{tpu_custom_call.1} parent=1 // pred_check_branch
      %13 = sbr.rel (0) target = $region5
    $region4: #{tpu_custom_call.1} parent=1 // pred_region
      %s15 = ssub.s32 4096, 4096
      %16 = vsyncadd [#allocation3], %s15
      %s17 = sshll.u32 [#allocation2], 4
      %s18 = int_to_ptr.vmem [resolvable:$true] %s17
      %23 = dma.hbm_to_vmem [thread:$0]  %s0, 4096, %s18, [#allocation3], 128, 128, 8
    $region5: #{tpu_custom_call.1} parent=1 // pred_fallthru
      _
    // Predicated region
    $region6: #{tpu_custom_call.1} parent=1 // pred_check
      _
    $region7: #{tpu_custom_call.1} parent=1 // pred_check_branch
      %25 = sbr.rel (0) target = $region9
    $region8: #{tpu_custom_call.1} parent=1 // pred_region
      %s27 = ssub.s32 2048, 2048
      %28 = vsyncadd [#allocation6], %s27
      %s29 = sshll.u32 [#allocation5], 4
      %s30 = int_to_ptr.vmem [resolvable:$true] %s29
      %35 = dma.hbm_to_vmem [thread:$0]  %s1, 2048, %s30, [#allocation6], 64, 64, 4
    $region9: #{tpu_custom_call.1} parent=1 // pred_fallthru
      _
    // Predicated region
    $region10: #{tpu_custom_call.1} parent=1 // pred_check
      _
    $region11: #{tpu_custom_call.1} parent=1 // pred_check_branch
      %37 = sbr.rel (0) target = $region13
    $region12: #{tpu_custom_call.1} parent=1 // pred_region
      _
    $region13: #{tpu_custom_call.1} parent=1 // pred_fallthru
      _
    // Predicated region
    $region14: #{tpu_custom_call.1} parent=1 // pred_check
      _
    $region15: #{tpu_custom_call.1} parent=1 // pred_check_branch
      %39 = sbr.rel (0) target = $region17
    $region16: #{tpu_custom_call.1} parent=1 // pred_region
      _
    $region17: #{tpu_custom_call.1} parent=1 // pred_fallthru
      _
    // Predicated region
    $region18: #{tpu_custom_call.1} parent=1 // pred_check
      _
    $region19: #{tpu_custom_call.1} parent=1 // pred_check_branch
      %41 = sbr.rel (0) target = $region21
    $region20: #{tpu_custom_call.1} parent=1 // pred_region
      %42 = dma.done [#allocation3], 4096
    $region21: #{tpu_custom_call.1} parent=1 // pred_fallthru
      _
    // Predicated region
    $region22: #{tpu_custom_call.1} parent=1 // pred_check
      _
    $region23: #{tpu_custom_call.1} parent=1 // pred_check_branch
      %44 = sbr.rel (0) target = $region25
    $region24: #{tpu_custom_call.1} parent=1 // pred_region
      %45 = dma.done [#allocation6], 2048
    $region25: #{tpu_custom_call.1} parent=1 // pred_fallthru
      _
    %v47 = vld [vmem:[#allocation2] sm:$0xff]
    %v48 = vld [vmem:[#allocation2 + $0x8] sm:$0xff]
    %v49 = vld [vmem:[#allocation2 + $0x10] sm:$0xff]
    %v50 = vld [vmem:[#allocation2 + $0x18] sm:$0xff]
    %v51 = vld [vmem:[#allocation2 + $0x20] sm:$0xff]
    %v52 = vld [vmem:[#allocation2 + $0x28] sm:$0xff]
    %v53 = vld [vmem:[#allocation2 + $0x30] sm:$0xff]
    %v54 = vld [vmem:[#allocation2 + $0x38] sm:$0xff]
    %v55 = vld [vmem:[#allocation2 + $0x40] sm:$0xff]
    %v56 = vld [vmem:[#allocation2 + $0x48] sm:$0xff]
    %v57 = vld [vmem:[#allocation2 + $0x50] sm:$0xff]
    %v58 = vld [vmem:[#allocation2 + $0x58] sm:$0xff]
    %v59 = vld [vmem:[#allocation2 + $0x60] sm:$0xff]
    %v60 = vld [vmem:[#allocation2 + $0x68] sm:$0xff]
    %v61 = vld [vmem:[#allocation2 + $0x70] sm:$0xff]
    %v62 = vld [vmem:[#allocation2 + $0x78] sm:$0xff]
    %v63 = vld [vmem:[#allocation2 + $0x80] sm:$0xff]
    %v64 = vld [vmem:[#allocation2 + $0x88] sm:$0xff]
    %v65 = vld [vmem:[#allocation2 + $0x90] sm:$0xff]
    %v66 = vld [vmem:[#allocation2 + $0x98] sm:$0xff]
    %v67 = vld [vmem:[#allocation2 + $0xa0] sm:$0xff]
    %v68 = vld [vmem:[#allocation2 + $0xa8] sm:$0xff]
    %v69 = vld [vmem:[#allocation2 + $0xb0] sm:$0xff]
    %v70 = vld [vmem:[#allocation2 + $0xb8] sm:$0xff]
    %v71 = vld [vmem:[#allocation2 + $0xc0] sm:$0xff]
    %v72 = vld [vmem:[#allocation2 + $0xc8] sm:$0xff]
    %v73 = vld [vmem:[#allocation2 + $0xd0] sm:$0xff]
    %v74 = vld [vmem:[#allocation2 + $0xd8] sm:$0xff]
    %v75 = vld [vmem:[#allocation2 + $0xe0] sm:$0xff]
    %v76 = vld [vmem:[#allocation2 + $0xe8] sm:$0xff]
    %v77 = vld [vmem:[#allocation2 + $0xf0] sm:$0xff]
    %v78 = vld [vmem:[#allocation2 + $0xf8] sm:$0xff]
    %v79 = vld [vmem:[#allocation5] sm:$0xf]
    %v80 = vld [vmem:[#allocation5 + $0x4] sm:$0xf]
    %v81 = vld [vmem:[#allocation5 + $0x8] sm:$0xf]
    %v82 = vld [vmem:[#allocation5 + $0xc] sm:$0xf]
    %v83 = vld [vmem:[#allocation5 + $0x10] sm:$0xf]
    %v84 = vld [vmem:[#allocation5 + $0x14] sm:$0xf]
    %v85 = vld [vmem:[#allocation5 + $0x18] sm:$0xf]
    %v86 = vld [vmem:[#allocation5 + $0x1c] sm:$0xf]
    %v87 = vld [vmem:[#allocation5 + $0x20] sm:$0xf]
    %v88 = vld [vmem:[#allocation5 + $0x24] sm:$0xf]
    %v89 = vld [vmem:[#allocation5 + $0x28] sm:$0xf]
    %v90 = vld [vmem:[#allocation5 + $0x2c] sm:$0xf]
    %v91 = vld [vmem:[#allocation5 + $0x30] sm:$0xf]
    %v92 = vld [vmem:[#allocation5 + $0x34] sm:$0xf]
    %v93 = vld [vmem:[#allocation5 + $0x38] sm:$0xf]
    %v94 = vld [vmem:[#allocation5 + $0x3c] sm:$0xf]
    %v95 = vld [vmem:[#allocation5 + $0x40] sm:$0xf]
    %v96 = vld [vmem:[#allocation5 + $0x44] sm:$0xf]
    %v97 = vld [vmem:[#allocation5 + $0x48] sm:$0xf]
    %v98 = vld [vmem:[#allocation5 + $0x4c] sm:$0xf]
    %v99 = vld [vmem:[#allocation5 + $0x50] sm:$0xf]
    %v100 = vld [vmem:[#allocation5 + $0x54] sm:$0xf]
    %v101 = vld [vmem:[#allocation5 + $0x58] sm:$0xf]
    %v102 = vld [vmem:[#allocation5 + $0x5c] sm:$0xf]
    %v103 = vld [vmem:[#allocation5 + $0x60] sm:$0xf]
    %v104 = vld [vmem:[#allocation5 + $0x64] sm:$0xf]
    %v105 = vld [vmem:[#allocation5 + $0x68] sm:$0xf]
    %v106 = vld [vmem:[#allocation5 + $0x6c] sm:$0xf]
    %v107 = vld [vmem:[#allocation5 + $0x70] sm:$0xf]
    %v108 = vld [vmem:[#allocation5 + $0x74] sm:$0xf]
    %v109 = vld [vmem:[#allocation5 + $0x78] sm:$0xf]
    %v110 = vld [vmem:[#allocation5 + $0x7c] sm:$0xf]
    %v143 = vunpack.c.l.b16 %v47
    %v144 = vunpack.c.h.b16 %v47
    %v145 = vunpack.c.l.b16 %v48
    %v146 = vunpack.c.h.b16 %v48
    %v147 = vunpack.c.l.b16 %v49
    %v148 = vunpack.c.h.b16 %v49
    %v149 = vunpack.c.l.b16 %v50
    %v150 = vunpack.c.h.b16 %v50
    %v151 = vunpack.c.l.b16 %v51
    %v152 = vunpack.c.h.b16 %v51
    %v153 = vunpack.c.l.b16 %v52
    %v154 = vunpack.c.h.b16 %v52
    %v155 = vunpack.c.l.b16 %v53
    %v156 = vunpack.c.h.b16 %v53
    %v157 = vunpack.c.l.b16 %v54
    %v158 = vunpack.c.h.b16 %v54
    %v159 = vunpack.c.l.b16 %v55
    %v160 = vunpack.c.h.b16 %v55
    %v161 = vunpack.c.l.b16 %v56
    %v162 = vunpack.c.h.b16 %v56
    %v163 = vunpack.c.l.b16 %v57
    %v164 = vunpack.c.h.b16 %v57
    %v165 = vunpack.c.l.b16 %v58
    %v166 = vunpack.c.h.b16 %v58
    %v167 = vunpack.c.l.b16 %v59
    %v168 = vunpack.c.h.b16 %v59
    %v169 = vunpack.c.l.b16 %v60
    %v170 = vunpack.c.h.b16 %v60
    %v171 = vunpack.c.l.b16 %v61
    %v172 = vunpack.c.h.b16 %v61
    %v173 = vunpack.c.l.b16 %v62
    %v174 = vunpack.c.h.b16 %v62
    %v175 = vunpack.c.l.b16 %v63
    %v176 = vunpack.c.h.b16 %v63
    %v177 = vunpack.c.l.b16 %v64
    %v178 = vunpack.c.h.b16 %v64
    %v179 = vunpack.c.l.b16 %v65
    %v180 = vunpack.c.h.b16 %v65
    %v181 = vunpack.c.l.b16 %v66
    %v182 = vunpack.c.h.b16 %v66
    %v183 = vunpack.c.l.b16 %v67
    %v184 = vunpack.c.h.b16 %v67
    %v185 = vunpack.c.l.b16 %v68
    %v186 = vunpack.c.h.b16 %v68
    %v187 = vunpack.c.l.b16 %v69
    %v188 = vunpack.c.h.b16 %v69
    %v189 = vunpack.c.l.b16 %v70
    %v190 = vunpack.c.h.b16 %v70
    %v191 = vunpack.c.l.b16 %v71
    %v192 = vunpack.c.h.b16 %v71
    %v193 = vunpack.c.l.b16 %v72
    %v194 = vunpack.c.h.b16 %v72
    %v195 = vunpack.c.l.b16 %v73
    %v196 = vunpack.c.h.b16 %v73
    %v197 = vunpack.c.l.b16 %v74
    %v198 = vunpack.c.h.b16 %v74
    %v199 = vunpack.c.l.b16 %v75
    %v200 = vunpack.c.h.b16 %v75
    %v201 = vunpack.c.l.b16 %v76
    %v202 = vunpack.c.h.b16 %v76
    %v203 = vunpack.c.l.b16 %v77
    %v204 = vunpack.c.h.b16 %v77
    %v205 = vunpack.c.l.b16 %v78
    %v206 = vunpack.c.h.b16 %v78
    %v207 = vpack.c.b16 %v145, %v143
    %v208 = vpack.c.b16 %v146, %v144
    %v209 = vpack.c.b16 %v149, %v147
    %v210 = vpack.c.b16 %v150, %v148
    %v211 = vpack.c.b16 %v153, %v151
    %v212 = vpack.c.b16 %v154, %v152
    %v213 = vpack.c.b16 %v157, %v155
    %v214 = vpack.c.b16 %v158, %v156
    %v215 = vpack.c.b16 %v161, %v159
    %v216 = vpack.c.b16 %v162, %v160
    %v217 = vpack.c.b16 %v165, %v163
    %v218 = vpack.c.b16 %v166, %v164
    %v219 = vpack.c.b16 %v169, %v167
    %v220 = vpack.c.b16 %v170, %v168
    %v221 = vpack.c.b16 %v173, %v171
    %v222 = vpack.c.b16 %v174, %v172
    %v223 = vpack.c.b16 %v177, %v175
    %v224 = vpack.c.b16 %v178, %v176
    %v225 = vpack.c.b16 %v181, %v179
    %v226 = vpack.c.b16 %v182, %v180
    %v227 = vpack.c.b16 %v185, %v183
    %v228 = vpack.c.b16 %v186, %v184
    %v229 = vpack.c.b16 %v189, %v187
    %v230 = vpack.c.b16 %v190, %v188
    %v231 = vpack.c.b16 %v193, %v191
    %v232 = vpack.c.b16 %v194, %v192
    %v233 = vpack.c.b16 %v197, %v195
    %v234 = vpack.c.b16 %v198, %v196
    %v235 = vpack.c.b16 %v201, %v199
    %v236 = vpack.c.b16 %v202, %v200
    %v237 = vpack.c.b16 %v205, %v203
    %v238 = vpack.c.b16 %v206, %v204
    %v303 = vunpack.c.l.b16 %v79
    %v304 = vunpack.c.l.b16 %v80
    %v305 = vunpack.c.l.b16 %v81
    %v306 = vunpack.c.l.b16 %v82
    %v307 = vunpack.c.l.b16 %v83
    %v308 = vunpack.c.l.b16 %v84
    %v309 = vunpack.c.l.b16 %v85
    %v310 = vunpack.c.l.b16 %v86
    %v311 = vunpack.c.l.b16 %v87
    %v312 = vunpack.c.l.b16 %v88
    %v313 = vunpack.c.l.b16 %v89
    %v314 = vunpack.c.l.b16 %v90
    %v315 = vunpack.c.l.b16 %v91
    %v316 = vunpack.c.l.b16 %v92
    %v317 = vunpack.c.l.b16 %v93
    %v318 = vunpack.c.l.b16 %v94
    %v319 = vunpack.c.l.b16 %v95
    %v320 = vunpack.c.l.b16 %v96
    %v321 = vunpack.c.l.b16 %v97
    %v322 = vunpack.c.l.b16 %v98
    %v323 = vunpack.c.l.b16 %v99
    %v324 = vunpack.c.l.b16 %v100
    %v325 = vunpack.c.l.b16 %v101
    %v326 = vunpack.c.l.b16 %v102
    %v327 = vunpack.c.l.b16 %v103
    %v328 = vunpack.c.l.b16 %v104
    %v329 = vunpack.c.l.b16 %v105
    %v330 = vunpack.c.l.b16 %v106
    %v331 = vunpack.c.l.b16 %v107
    %v332 = vunpack.c.l.b16 %v108
    %v333 = vunpack.c.l.b16 %v109
    %v334 = vunpack.c.l.b16 %v110
    %v335 = vpack.c.b16 %v304, %v303
    %v336 = vpack.c.b16 %v306, %v305
    %v337 = vpack.c.b16 %v308, %v307
    %v338 = vpack.c.b16 %v310, %v309
    %v339 = vpack.c.b16 %v312, %v311
    %v340 = vpack.c.b16 %v314, %v313
    %v341 = vpack.c.b16 %v316, %v315
    %v342 = vpack.c.b16 %v318, %v317
    %v343 = vpack.c.b16 %v320, %v319
    %v344 = vpack.c.b16 %v322, %v321
    %v345 = vpack.c.b16 %v324, %v323
    %v346 = vpack.c.b16 %v326, %v325
    %v347 = vpack.c.b16 %v328, %v327
    %v348 = vpack.c.b16 %v330, %v329
    %v349 = vpack.c.b16 %v332, %v331
    %v350 = vpack.c.b16 %v334, %v333
    %367 = vmatprep.subr.bf16.mxu0 0
    %368 = vmatpush1.bf16.msra.mxu0 %v335
    %369 = vmatprep.subr.bf16.mxu0 0
    %370 = vmatpush1.bf16.msra.mxu0 %v336
    %371 = vmatprep.subr.bf16.mxu0 0
    %372 = vmatpush1.bf16.msra.mxu0 %v337
    %373 = vmatprep.subr.bf16.mxu0 0
    %374 = vmatpush1.bf16.msra.mxu0 %v338
    %375 = vmatprep.subr.bf16.mxu0 0
    %376 = vmatpush1.bf16.msra.mxu0 %v339
    %377 = vmatprep.subr.bf16.mxu0 0
    %378 = vmatpush1.bf16.msra.mxu0 %v340
    %379 = vmatprep.subr.bf16.mxu0 0
    %380 = vmatpush1.bf16.msra.mxu0 %v341
    %381 = vmatprep.subr.bf16.mxu0 0
    %382 = vmatpush1.bf16.msra.mxu0 %v342
    %383 = vmatprep.subr.bf16.mxu0 0
    %384 = vmatpush1.bf16.msra.mxu0 %v343
    %385 = vmatprep.subr.bf16.mxu0 0
    %386 = vmatpush1.bf16.msra.mxu0 %v344
    %387 = vmatprep.subr.bf16.mxu0 0
    %388 = vmatpush1.bf16.msra.mxu0 %v345
    %389 = vmatprep.subr.bf16.mxu0 0
    %390 = vmatpush1.bf16.msra.mxu0 %v346
    %391 = vmatprep.subr.bf16.mxu0 0
    %392 = vmatpush1.bf16.msra.mxu0 %v347
    %393 = vmatprep.subr.bf16.mxu0 0
    %394 = vmatpush1.bf16.msra.mxu0 %v348
    %395 = vmatprep.subr.bf16.mxu0 0
    %396 = vmatpush1.bf16.msra.mxu0 %v349
    %397 = vmatprep.subr.bf16.mxu0 0
    %398 = vmatpush1.bf16.msra.mxu0 %v350
    %399 = vmatprep.mubr.bf16.mxu0 %v208
    %400 = vmatmul.mubr.bf16.gmra.mrb[0].mxu0 %v207
    %v401 = vpop.f32.mrb[0].mxu0
    %v402 = vadd.f32 0.0, %v401
    %v403 = vpop.f32.mrb[0].mxu0
    %v404 = vpop.f32.mrb[0].mxu0
    %v405 = vadd.f32 0.0, %v404
    %v406 = vpop.f32.mrb[0].mxu0
    %407 = vmatprep.mubr.bf16.mxu0 %v210
    %408 = vmatmul.mubr.bf16.gmra.mrb[0].mxu0 %v209
    %v409 = vpop.f32.mrb[0].mxu0
    %v410 = vadd.f32 0.0, %v409
    %v411 = vpop.f32.mrb[0].mxu0
    %v412 = vpop.f32.mrb[0].mxu0
    %v413 = vadd.f32 0.0, %v412
    %v414 = vpop.f32.mrb[0].mxu0
    %415 = vmatprep.mubr.bf16.mxu0 %v212
    %416 = vmatmul.mubr.bf16.gmra.mrb[0].mxu0 %v211
    %v417 = vpop.f32.mrb[0].mxu0
    %v418 = vadd.f32 0.0, %v417
    %v419 = vpop.f32.mrb[0].mxu0
    %v420 = vpop.f32.mrb[0].mxu0
    %v421 = vadd.f32 0.0, %v420
    %v422 = vpop.f32.mrb[0].mxu0
    %423 = vmatprep.mubr.bf16.mxu0 %v214
    %424 = vmatmul.mubr.bf16.gmra.mrb[0].mxu0 %v213
    %v425 = vpop.f32.mrb[0].mxu0
    %v426 = vadd.f32 0.0, %v425
    %v427 = vpop.f32.mrb[0].mxu0
    %v428 = vpop.f32.mrb[0].mxu0
    %v429 = vadd.f32 0.0, %v428
    %v430 = vpop.f32.mrb[0].mxu0
    %431 = vmatprep.mubr.bf16.mxu0 %v216
    %432 = vmatmul.mubr.bf16.gmra.mrb[0].mxu0 %v215
    %v433 = vpop.f32.mrb[0].mxu0
    %v434 = vadd.f32 0.0, %v433
    %v435 = vpop.f32.mrb[0].mxu0
    %v436 = vpop.f32.mrb[0].mxu0
    %v437 = vadd.f32 0.0, %v436
    %v438 = vpop.f32.mrb[0].mxu0
    %439 = vmatprep.mubr.bf16.mxu0 %v218
    %440 = vmatmul.mubr.bf16.gmra.mrb[0].mxu0 %v217
    %v441 = vpop.f32.mrb[0].mxu0
    %v442 = vadd.f32 0.0, %v441
    %v443 = vpop.f32.mrb[0].mxu0
    %v444 = vpop.f32.mrb[0].mxu0
    %v445 = vadd.f32 0.0, %v444
    %v446 = vpop.f32.mrb[0].mxu0
    %447 = vmatprep.mubr.bf16.mxu0 %v220
    %448 = vmatmul.mubr.bf16.gmra.mrb[0].mxu0 %v219
    %v449 = vpop.f32.mrb[0].mxu0
    %v450 = vadd.f32 0.0, %v449
    %v451 = vpop.f32.mrb[0].mxu0
    %v452 = vpop.f32.mrb[0].mxu0
    %v453 = vadd.f32 0.0, %v452
    %v454 = vpop.f32.mrb[0].mxu0
    %455 = vmatprep.mubr.bf16.mxu0 %v222
    %456 = vmatmul.mubr.bf16.gmra.mrb[0].mxu0 %v221
    %v457 = vpop.f32.mrb[0].mxu0
    %v458 = vadd.f32 0.0, %v457
    %v459 = vpop.f32.mrb[0].mxu0
    %v460 = vpop.f32.mrb[0].mxu0
    %v461 = vadd.f32 0.0, %v460
    %v462 = vpop.f32.mrb[0].mxu0
    %463 = vmatprep.mubr.bf16.mxu0 %v224
    %464 = vmatmul.mubr.bf16.gmra.mrb[0].mxu0 %v223
    %v465 = vpop.f32.mrb[0].mxu0
    %v466 = vadd.f32 0.0, %v465
    %v467 = vpop.f32.mrb[0].mxu0
    %v468 = vpop.f32.mrb[0].mxu0
    %v469 = vadd.f32 0.0, %v468
    %v470 = vpop.f32.mrb[0].mxu0
    %471 = vmatprep.mubr.bf16.mxu0 %v226
    %472 = vmatmul.mubr.bf16.gmra.mrb[0].mxu0 %v225
    %v473 = vpop.f32.mrb[0].mxu0
    %v474 = vadd.f32 0.0, %v473
    %v475 = vpop.f32.mrb[0].mxu0
    %v476 = vpop.f32.mrb[0].mxu0
    %v477 = vadd.f32 0.0, %v476
    %v478 = vpop.f32.mrb[0].mxu0
    %479 = vmatprep.mubr.bf16.mxu0 %v228
    %480 = vmatmul.mubr.bf16.gmra.mrb[0].mxu0 %v227
    %v481 = vpop.f32.mrb[0].mxu0
    %v482 = vadd.f32 0.0, %v481
    %v483 = vpop.f32.mrb[0].mxu0
    %v484 = vpop.f32.mrb[0].mxu0
    %v485 = vadd.f32 0.0, %v484
    %v486 = vpop.f32.mrb[0].mxu0
    %487 = vmatprep.mubr.bf16.mxu0 %v230
    %488 = vmatmul.mubr.bf16.gmra.mrb[0].mxu0 %v229
    %v489 = vpop.f32.mrb[0].mxu0
    %v490 = vadd.f32 0.0, %v489
    %v491 = vpop.f32.mrb[0].mxu0
    %v492 = vpop.f32.mrb[0].mxu0
    %v493 = vadd.f32 0.0, %v492
    %v494 = vpop.f32.mrb[0].mxu0
    %495 = vmatprep.mubr.bf16.mxu0 %v232
    %496 = vmatmul.mubr.bf16.gmra.mrb[0].mxu0 %v231
    %v497 = vpop.f32.mrb[0].mxu0
    %v498 = vadd.f32 0.0, %v497
    %v499 = vpop.f32.mrb[0].mxu0
    %v500 = vpop.f32.mrb[0].mxu0
    %v501 = vadd.f32 0.0, %v500
    %v502 = vpop.f32.mrb[0].mxu0
    %503 = vmatprep.mubr.bf16.mxu0 %v234
    %504 = vmatmul.mubr.bf16.gmra.mrb[0].mxu0 %v233
    %v505 = vpop.f32.mrb[0].mxu0
    %v506 = vadd.f32 0.0, %v505
    %v507 = vpop.f32.mrb[0].mxu0
    %v508 = vpop.f32.mrb[0].mxu0
    %v509 = vadd.f32 0.0, %v508
    %v510 = vpop.f32.mrb[0].mxu0
    %511 = vmatprep.mubr.bf16.mxu0 %v236
    %512 = vmatmul.mubr.bf16.gmra.mrb[0].mxu0 %v235
    %v513 = vpop.f32.mrb[0].mxu0
    %v514 = vadd.f32 0.0, %v513
    %v515 = vpop.f32.mrb[0].mxu0
    %v516 = vpop.f32.mrb[0].mxu0
    %v517 = vadd.f32 0.0, %v516
    %v518 = vpop.f32.mrb[0].mxu0
    %519 = vmatprep.mubr.bf16.mxu0 %v238
    %520 = vmatmul.mubr.bf16.gmra.mrb[0].mxu0 %v237
    %v521 = vpop.f32.mrb[0].mxu0
    %v522 = vadd.f32 0.0, %v521
    %v523 = vpop.f32.mrb[0].mxu0
    %v524 = vpop.f32.mrb[0].mxu0
    %v525 = vadd.f32 0.0, %v524
    %v526 = vpop.f32.mrb[0].mxu0
    %527 = vdwg.mxu0
    %v528 = vld [vmem:[%s2] sm:$0x1]
    %v530 = vlaneseq
    %v531 = vshrl.u32 %v530, 7
    %v532 = vsub.s32 0, %v531
    %v533 = vrot.slane %v528, %v532
    %v535 = vmul.f32 %v402, %v533
    %v536 = vmul.f32 %v405, %v533
    %v537 = vmul.f32 %v410, %v533
    %v538 = vmul.f32 %v413, %v533
    %v539 = vmul.f32 %v418, %v533
    %v540 = vmul.f32 %v421, %v533
    %v541 = vmul.f32 %v426, %v533
    %v542 = vmul.f32 %v429, %v533
    %v543 = vmul.f32 %v434, %v533
    %v544 = vmul.f32 %v437, %v533
    %v545 = vmul.f32 %v442, %v533
    %v546 = vmul.f32 %v445, %v533
    %v547 = vmul.f32 %v450, %v533
    %v548 = vmul.f32 %v453, %v533
    %v549 = vmul.f32 %v458, %v533
    %v550 = vmul.f32 %v461, %v533
    %v551 = vmul.f32 %v466, %v533
    %v552 = vmul.f32 %v469, %v533
    %v553 = vmul.f32 %v474, %v533
    %v554 = vmul.f32 %v477, %v533
    %v555 = vmul.f32 %v482, %v533
    %v556 = vmul.f32 %v485, %v533
    %v557 = vmul.f32 %v490, %v533
    %v558 = vmul.f32 %v493, %v533
    %v559 = vmul.f32 %v498, %v533
    %v560 = vmul.f32 %v501, %v533
    %v561 = vmul.f32 %v506, %v533
    %v562 = vmul.f32 %v509, %v533
    %v563 = vmul.f32 %v514, %v533
    %v564 = vmul.f32 %v517, %v533
    %v565 = vmul.f32 %v522, %v533
    %v566 = vmul.f32 %v525, %v533
    %v567 = vld [vmem:[%s3] sm:$0x1]
    %v569 = vlaneseq
    %v570 = vshrl.u32 %v569, 7
    %v571 = vsub.s32 0, %v570
    %v572 = vrot.slane %v567, %v571
    %v574 = vadd.f32 %v535, %v572
    %v575 = vadd.f32 %v536, %v572
    %v576 = vadd.f32 %v537, %v572
    %v577 = vadd.f32 %v538, %v572
    %v578 = vadd.f32 %v539, %v572
    %v579 = vadd.f32 %v540, %v572
    %v580 = vadd.f32 %v541, %v572
    %v581 = vadd.f32 %v542, %v572
    %v582 = vadd.f32 %v543, %v572
    %v583 = vadd.f32 %v544, %v572
    %v584 = vadd.f32 %v545, %v572
    %v585 = vadd.f32 %v546, %v572
    %v586 = vadd.f32 %v547, %v572
    %v587 = vadd.f32 %v548, %v572
    %v588 = vadd.f32 %v549, %v572
    %v589 = vadd.f32 %v550, %v572
    %v590 = vadd.f32 %v551, %v572
    %v591 = vadd.f32 %v552, %v572
    %v592 = vadd.f32 %v553, %v572
    %v593 = vadd.f32 %v554, %v572
    %v594 = vadd.f32 %v555, %v572
    %v595 = vadd.f32 %v556, %v572
    %v596 = vadd.f32 %v557, %v572
    %v597 = vadd.f32 %v558, %v572
    %v598 = vadd.f32 %v559, %v572
    %v599 = vadd.f32 %v560, %v572
    %v600 = vadd.f32 %v561, %v572
    %v601 = vadd.f32 %v562, %v572
    %v602 = vadd.f32 %v563, %v572
    %v603 = vadd.f32 %v564, %v572
    %v604 = vadd.f32 %v565, %v572
    %v605 = vadd.f32 %v566, %v572
    %v606 = vmax.f32 %v574, 0.0
    %v607 = vmax.f32 %v575, 0.0
    %v608 = vmax.f32 %v576, 0.0
    %v609 = vmax.f32 %v577, 0.0
    %v610 = vmax.f32 %v578, 0.0
    %v611 = vmax.f32 %v579, 0.0
    %v612 = vmax.f32 %v580, 0.0
    %v613 = vmax.f32 %v581, 0.0
    %v614 = vmax.f32 %v582, 0.0
    %v615 = vmax.f32 %v583, 0.0
    %v616 = vmax.f32 %v584, 0.0
    %v617 = vmax.f32 %v585, 0.0
    %v618 = vmax.f32 %v586, 0.0
    %v619 = vmax.f32 %v587, 0.0
    %v620 = vmax.f32 %v588, 0.0
    %v621 = vmax.f32 %v589, 0.0
    %v622 = vmax.f32 %v590, 0.0
    %v623 = vmax.f32 %v591, 0.0
    %v624 = vmax.f32 %v592, 0.0
    %v625 = vmax.f32 %v593, 0.0
    %v626 = vmax.f32 %v594, 0.0
    %v627 = vmax.f32 %v595, 0.0
    %v628 = vmax.f32 %v596, 0.0
    %v629 = vmax.f32 %v597, 0.0
    %v630 = vmax.f32 %v598, 0.0
    %v631 = vmax.f32 %v599, 0.0
    %v632 = vmax.f32 %v600, 0.0
    %v633 = vmax.f32 %v601, 0.0
    %v634 = vmax.f32 %v602, 0.0
    %v635 = vmax.f32 %v603, 0.0
    %v636 = vmax.f32 %v604, 0.0
    %v637 = vmax.f32 %v605, 0.0
    %638 = vst [vmem:[#allocation7] sm:$0xff] %v606
    %639 = vst [vmem:[#allocation7 + $0x8] sm:$0xff] %v607
    %640 = vst [vmem:[#allocation7 + $0x10] sm:$0xff] %v608
    %641 = vst [vmem:[#allocation7 + $0x18] sm:$0xff] %v609
    %642 = vst [vmem:[#allocation7 + $0x20] sm:$0xff] %v610
    %643 = vst [vmem:[#allocation7 + $0x28] sm:$0xff] %v611
    %644 = vst [vmem:[#allocation7 + $0x30] sm:$0xff] %v612
    %645 = vst [vmem:[#allocation7 + $0x38] sm:$0xff] %v613
    %646 = vst [vmem:[#allocation7 + $0x40] sm:$0xff] %v614
    %647 = vst [vmem:[#allocation7 + $0x48] sm:$0xff] %v615
    %648 = vst [vmem:[#allocation7 + $0x50] sm:$0xff] %v616
    %649 = vst [vmem:[#allocation7 + $0x58] sm:$0xff] %v617
    %650 = vst [vmem:[#allocation7 + $0x60] sm:$0xff] %v618
    %651 = vst [vmem:[#allocation7 + $0x68] sm:$0xff] %v619
    %652 = vst [vmem:[#allocation7 + $0x70] sm:$0xff] %v620
    %653 = vst [vmem:[#allocation7 + $0x78] sm:$0xff] %v621
    %654 = vst [vmem:[#allocation7 + $0x80] sm:$0xff] %v622
    %655 = vst [vmem:[#allocation7 + $0x88] sm:$0xff] %v623
    %656 = vst [vmem:[#allocation7 + $0x90] sm:$0xff] %v624
    %657 = vst [vmem:[#allocation7 + $0x98] sm:$0xff] %v625
    %658 = vst [vmem:[#allocation7 + $0xa0] sm:$0xff] %v626
    %659 = vst [vmem:[#allocation7 + $0xa8] sm:$0xff] %v627
    %660 = vst [vmem:[#allocation7 + $0xb0] sm:$0xff] %v628
    %661 = vst [vmem:[#allocation7 + $0xb8] sm:$0xff] %v629
    %662 = vst [vmem:[#allocation7 + $0xc0] sm:$0xff] %v630
    %663 = vst [vmem:[#allocation7 + $0xc8] sm:$0xff] %v631
    %664 = vst [vmem:[#allocation7 + $0xd0] sm:$0xff] %v632
    %665 = vst [vmem:[#allocation7 + $0xd8] sm:$0xff] %v633
    %666 = vst [vmem:[#allocation7 + $0xe0] sm:$0xff] %v634
    %667 = vst [vmem:[#allocation7 + $0xe8] sm:$0xff] %v635
    %668 = vst [vmem:[#allocation7 + $0xf0] sm:$0xff] %v636
    %669 = vst [vmem:[#allocation7 + $0xf8] sm:$0xff] %v637
    // Predicated region
    $region26: #{tpu_custom_call.1} parent=1 // pred_check
      _
    $region27: #{tpu_custom_call.1} parent=1 // pred_check_branch
      %671 = sbr.rel (0) target = $region29
    $region28: #{tpu_custom_call.1} parent=1 // pred_region
      %s673 = ssub.s32 4096, 4096
      %674 = vsyncadd [#allocation4], %s673
      %s675 = sshll.u32 [#allocation7], 4
      %s676 = int_to_ptr.vmem [resolvable:$true] %s675
      %681 = dma.vmem_to_hbm [thread:$0]  %s676, 4096, %s4, [#allocation4], 128, 128, 8
    $region29: #{tpu_custom_call.1} parent=1 // pred_fallthru
      _
    // Predicated region
    $region30: #{tpu_custom_call.1} parent=1 // pred_check
      _
    $region31: #{tpu_custom_call.1} parent=1 // pred_check_branch
      %683 = sbr.rel (0) target = $region33
    $region32: #{tpu_custom_call.1} parent=1 // pred_region
      %684 = dma.done [#allocation4], 4096
    $region33: #{tpu_custom_call.1} parent=1 // pred_fallthru
      _
    %685 = vsyncpa [#allocation3], 1
    %686 = vsyncpa [#allocation6], 1
    %687 = vsyncpa [#allocation4], 1

</llo_original>
